<compile_context>
chip_gen: v5e
topology: v5e:2x2
jax: 0.10.0
libtpu: 0.0.40
codegen_flags: <defaults>
</compile_context>

<pallas_src>
import functools

import jax
import jax.numpy as jnp
from jax.experimental import pallas as pl
from jax.experimental.pallas import tpu as pltpu


def _coslu_kernel(alpha_ref, beta_ref, x_ref, o_ref, *, approx_sigmoid: bool):
    # alpha_ref / beta_ref: (1,) scalars in SMEM.
    a = alpha_ref[0].astype(jnp.float32)
    b = beta_ref[0].astype(jnp.float32)

    # Compute in f32 regardless of storage dtype; cast once at the store.
    x = x_ref[...].astype(jnp.float32)

    if approx_sigmoid:
        # exp -> EUP, approx reciprocal -> EUP vrcp (cheap); one fewer exact
        # transcendental per element. Only worth it on v7x (EUP-limited).
        sig = pl.reciprocal(1.0 + jnp.exp(-x), approx=True)
    else:
        sig = jax.nn.sigmoid(x)

    y = (x + a * jnp.cos(b * x)) * sig
    o_ref[...] = y.astype(o_ref.dtype)


# Lane-dense slab width (multiple of 128) and row-tile size.
_LANE_COLS = 1024
_TILE_ROWS = 512  # (512, 1024) f32 tile = 2 MiB -> ~8 MiB with dbl-buffered in+out


def coslu(x: jax.Array, alpha: jax.Array, beta: jax.Array,
          *, approx_sigmoid: bool = False) -> jax.Array:
    """Applies CosLU elementwise. x may have any shape; alpha/beta are (1,)."""
    orig_shape = x.shape
    n = x.size
    if n == 0:
        return x

    C = _LANE_COLS
    flat = x.reshape(-1)

    # Rows of the lane-dense slab.
    rows = -(-n // C)
    if rows > _TILE_ROWS:
        # Pad rows up to a multiple of the row tile so every block is full.
        rows = -(-rows // _TILE_ROWS) * _TILE_ROWS
        tile_r = _TILE_ROWS
    else:
        # Single full-extent block (block dim == full array dim is allowed
        # even when it is not a multiple of 8).
        tile_r = rows
    grid_rows = rows // tile_r

    n_pad = rows * C
    if n_pad != n:
        flat = jnp.pad(flat, (0, n_pad - n))
    x2d = flat.reshape(rows, C)

    itemsize = x.dtype.itemsize
    cost = pl.CostEstimate(
        flops=4 * n_pad,
        transcendentals=3 * n_pad,
        bytes_accessed=2 * n_pad * itemsize,
    )

    kernel = functools.partial(_coslu_kernel, approx_sigmoid=approx_sigmoid)

    out = pl.pallas_call(
        kernel,
        out_shape=jax.ShapeDtypeStruct((rows, C), x.dtype),
        grid=(grid_rows,),
        in_specs=[
            pl.BlockSpec(memory_space=pltpu.SMEM),           # alpha (1,)
            pl.BlockSpec(memory_space=pltpu.SMEM),           # beta  (1,)
            pl.BlockSpec((tile_r, C), lambda i: (i, 0)),     # x tile
        ],
        out_specs=pl.BlockSpec((tile_r, C), lambda i: (i, 0)),
        compiler_params=pltpu.CompilerParams(
            dimension_semantics=("parallel",),
        ),
        cost_estimate=cost,
    )(alpha, beta, x2d)

    return out.reshape(-1)[:n].reshape(orig_shape)


def coslu_reference(x, alpha, beta):
    return (x + alpha[0] * jnp.cos(beta[0] * x)) * jax.nn.sigmoid(x)


if __name__ == "__main__":
    key = jax.random.PRNGKey(0)

    # --- Test 1: NCHW input (like PyTorch conv activations), default params ---
    x1 = jax.random.normal(key, (2, 4, 16, 16), dtype=jnp.float32)
    alpha = jnp.array([1.0], dtype=jnp.float32)   # CosLU(a=1.0)
    beta = jnp.array([1.0], dtype=jnp.float32)    # CosLU(b=1.0)

    y1 = jax.block_until_ready(coslu(x1, alpha, beta))
    y1_ref = coslu_reference(x1, alpha, beta)
    assert y1.shape == x1.shape
    assert jnp.allclose(y1, y1_ref, atol=1e-6, rtol=1e-6)

    # --- Test 2: ragged size (not a multiple of 128) exercises the pad path ---
    k2 = jax.random.fold_in(key, 1)
    x2 = jax.random.normal(k2, (3, 5, 7), dtype=jnp.float32)
    a2 = jnp.array([2.0], dtype=jnp.float32)
    b2 = jnp.array([0.5], dtype=jnp.float32)
    y2 = jax.block_until_ready(coslu(x2, a2, b2))
    assert y2.shape == x2.shape
    assert jnp.allclose(y2, coslu_reference(x2, a2, b2), atol=1e-6, rtol=1e-6)

    # --- Test 3: larger tensor exercises the multi-tile (pipelined) grid ---
    k3 = jax.random.fold_in(key, 2)
    x3 = jax.random.normal(k3, (1, 8, 256, 257), dtype=jnp.float32)  # 526336 elems
    y3 = jax.block_until_ready(coslu(x3, alpha, beta))
    assert y3.shape == x3.shape
    assert jnp.allclose(y3, coslu_reference(x3, alpha, beta), atol=1e-6, rtol=1e-6)

    # --- Test 4: bf16 storage, f32 internal compute ---
    x4 = x1.astype(jnp.bfloat16)
    y4 = jax.block_until_ready(coslu(x4, alpha, beta))
    y4_ref = coslu_reference(x4.astype(jnp.float32), alpha, beta).astype(jnp.bfloat16)
    assert y4.dtype == jnp.bfloat16
    assert jnp.allclose(y4.astype(jnp.float32), y4_ref.astype(jnp.float32),
                        atol=2e-2, rtol=2e-2)

    print("KERNEL_OK")
</pallas_src>

<mosaic_0001>
module attributes {stable_mosaic.version = 11 : i64} {
  func.func @_coslu_kernel(%arg0: i32, %arg1: memref<1xf32, #tpu.memory_space<smem>>, %arg2: memref<1xf32, #tpu.memory_space<smem>>, %arg3: memref<2x1024xf32, #tpu.memory_space<vmem>>, %arg4: memref<2x1024xf32, #tpu.memory_space<vmem>>) attributes {dimension_semantics = [#tpu.dimension_semantics<parallel>], iteration_bounds = array<i64: 1>, scalar_prefetch = 0 : i64, scratch_operands = 0 : i64, tpu.core_type = #tpu.core_type<tc>, window_params = [{transform_indices = @transform_0, window_bounds = array<i64: 1>}, {transform_indices = @transform_1, window_bounds = array<i64: 1>}, {transform_indices = @transform_2, window_bounds = array<i64: 2, 1024>}, {transform_indices = @transform_3, window_bounds = array<i64: 2, 1024>}]} {
    %c0 = arith.constant 0 : index
    %0 = memref.load %arg1[%c0] : memref<1xf32, #tpu.memory_space<smem>>
    %c0_0 = arith.constant 0 : index
    %1 = memref.load %arg2[%c0_0] : memref<1xf32, #tpu.memory_space<smem>>
    %c0_1 = arith.constant 0 : index
    %c0_2 = arith.constant 0 : index
    %2 = vector.load %arg3[%c0_1, %c0_2] : memref<2x1024xf32, #tpu.memory_space<vmem>>, vector<2x1024xf32>
    %3 = arith.negf %2 : vector<2x1024xf32>
    %4 = math.exp %3 : vector<2x1024xf32>
    %cst = arith.constant 1.000000e+00 : f32
    %5 = vector.broadcast %cst : f32 to vector<2x1024xf32>
    %6 = arith.addf %5, %4 : vector<2x1024xf32>
    %7 = arith.divf %5, %6 : vector<2x1024xf32>
    %8 = vector.broadcast %1 : f32 to vector<2x1024xf32>
    %9 = arith.mulf %8, %2 : vector<2x1024xf32>
    %10 = math.cos %9 : vector<2x1024xf32>
    %11 = vector.broadcast %0 : f32 to vector<2x1024xf32>
    %12 = arith.mulf %11, %10 : vector<2x1024xf32>
    %13 = arith.addf %2, %12 : vector<2x1024xf32>
    %14 = arith.mulf %13, %7 : vector<2x1024xf32>
    %c0_3 = arith.constant 0 : index
    %c0_4 = arith.constant 0 : index
    %15 = vector.load %arg4[%c0_3, %c0_4] : memref<2x1024xf32, #tpu.memory_space<vmem>>, vector<2x1024xf32>
    tpu.vector_store %arg4[%c0_3, %c0_4], %14 {strides = array<i32>} : memref<2x1024xf32, #tpu.memory_space<vmem>>, vector<2x1024xf32>,
    return
  }
  func.func @transform_0(%arg0: i32) -> i32 {
    %c0_i32 = arith.constant 0 : i32
    %c0_i32_0 = arith.constant 0 : i32
    return %c0_i32 : i32
  }
  func.func @transform_1(%arg0: i32) -> i32 {
    %c0_i32 = arith.constant 0 : i32
    %c0_i32_0 = arith.constant 0 : i32
    return %c0_i32 : i32
  }
  func.func @transform_2(%arg0: i32) -> (i32, i32) {
    %c0_i32 = arith.constant 0 : i32
    %c0_i32_0 = arith.constant 0 : i32
    return %arg0, %c0_i32 : i32, i32
  }
  func.func @transform_3(%arg0: i32) -> (i32, i32) {
    %c0_i32 = arith.constant 0 : i32
    %c0_i32_0 = arith.constant 0 : i32
    return %arg0, %c0_i32 : i32, i32
  }
}

</mosaic_0001>

<llo_original>
// kernel: tpu_custom_call.1
$region0: #{tpu_custom_call.1}
  #allocation0 [shape = 'u32[]', space=smem, size = 0x4, offset = 0x4, fixed_abs, tag = 'smem constant byte address 0x4 - core index']
  #allocation1 [shape = 'u32[72,128]{1,0:T(1,128)}', space=vmem, size = 0x9000, scoped, tag = 'internal scratch']
  #allocation2 [shape = 'f32[1]{0:T(128)S(6)}', space=smem, size = 0x200, scoped, tag = 'scoped memory for tpu_custom_call.1']
  #allocation3 [shape = 'f32[1]{0:T(128)S(6)}', space=smem, size = 0x200, scoped, tag = 'scoped memory for tpu_custom_call.1']
  %s0 = inlined_call_operand.<no memory space> [shape: f32[1], index: 0, kind: input, shape index: {}]
  %s1 = inlined_call_operand.<no memory space> [shape: f32[1], index: 1, kind: input, shape index: {}]
  %s2 = inlined_call_operand.hbm [shape: f32[2,1024], index: 2, kind: input, shape index: {}]
  %s3 = inlined_call_operand.hbm [shape: f32[2,1024], index: 3, kind: output, shape index: {}]
  %s4 = sld [smem:[#allocation0]]
  $region26: #{tpu_custom_call.1} parent=0
    _
  %s6 = ssub.s32 1, %s4
  %s7 = scalar_select 0, %s6, %s4
  %8 = sst [smem:[#allocation2]] %s0
  %9 = sst [smem:[#allocation3]] %s1
  $region1: #{tpu_custom_call.1} parent=0
    #allocation4 [shape = 'u8[8192]{0}', space=vmem, size = 0x2000, scoped, tag = 'input window, operand 2, single buffered']
    #allocation5 [shape = 's32[1]{0}', space=sflag, size = 0x4, scoped, tag = 'scoped memory for tpu_custom_call.1']
    #allocation6 [shape = 's32[1]{0}', space=sflag, size = 0x4, scoped, tag = 'scoped memory for tpu_custom_call.1']
    #allocation7 [shape = 'u8[8192]{0}', space=vmem, size = 0x2000, scoped, tag = 'output window, operand 0, single buffered']
    %10 = vsyncpa [#allocation5], 0
    %11 = vsyncpa [#allocation6], 0
    // Predicated region
    $region2: #{tpu_custom_call.1} parent=1 // pred_check
      _
    $region3: #{tpu_custom_call.1} parent=1 // pred_check_branch
      %13 = sbr.rel (0) target = $region5
    $region4: #{tpu_custom_call.1} parent=1 // pred_region
      _
    $region5: #{tpu_custom_call.1} parent=1 // pred_fallthru
      _
    // Predicated region
    $region6: #{tpu_custom_call.1} parent=1 // pred_check
      _
    $region7: #{tpu_custom_call.1} parent=1 // pred_check_branch
      %15 = sbr.rel (0) target = $region9
    $region8: #{tpu_custom_call.1} parent=1 // pred_region
      _
    $region9: #{tpu_custom_call.1} parent=1 // pred_fallthru
      _
    // Predicated region
    $region10: #{tpu_custom_call.1} parent=1 // pred_check
      _
    $region11: #{tpu_custom_call.1} parent=1 // pred_check_branch
      %17 = sbr.rel (0) target = $region13
    $region12: #{tpu_custom_call.1} parent=1 // pred_region
      %19 = vsyncadd [#allocation5], 0
      %s21 = sshll.u32 %s2, 4
      %s22 = int_to_ptr.hbm [resolvable:$true] %s21
      %s23 = sshll.u32 [#allocation4], 4
      %s24 = int_to_ptr.vmem [resolvable:$true] %s23
      %26 = dma.hbm_to_vmem [thread:$0]  %s22, 256, %s24, [#allocation5]
    $region13: #{tpu_custom_call.1} parent=1 // pred_fallthru
      _
    // Predicated region
    $region14: #{tpu_custom_call.1} parent=1 // pred_check
      _
    $region15: #{tpu_custom_call.1} parent=1 // pred_check_branch
      %28 = sbr.rel (0) target = $region17
    $region16: #{tpu_custom_call.1} parent=1 // pred_region
      %30 = dma.done [#allocation5], 256
    $region17: #{tpu_custom_call.1} parent=1 // pred_fallthru
      _
    %s31 = sld [smem:[#allocation2]]
    %s32 = sld [smem:[#allocation3]]
    %v33 = vld [vmem:[#allocation4] sm:$0xff]
    %v34 = vld [vmem:[#allocation4 + $0x8] sm:$0xff]
    %v35 = vxor.u32 %v33, 2147483648
    %v36 = vxor.u32 %v34, 2147483648
    %v37 = vmul.f32 %v35, 1.442695
    %v38 = vpow.pop %v37
    %v39 = vmul.f32 %v36, 1.442695
    %v40 = vpow.pop %v39
    %v41 = vadd.f32 %v38, 1.0
    %v42 = vadd.f32 %v40, 1.0
    %v43 = vrcp.pop %v41
    %v44 = vmul.f32 %v41, %v43
    %v45 = vsub.f32 1.0, %v44
    %v46 = vmul.f32 %v43, %v45
    %v47 = vadd.f32 %v43, %v46
    %vm48 = vweird.f32 %v41
    %vm49 = vweird.f32 %v43
    %vm50 = vmor %vm48, %vm49
    %v51 = vsel %vm50, %v43, %v47
    %v52 = vand.u32 2147483647, %v41
    %vm53 = vcmp.eq.f32.partialorder %v52, 8.507059e+37
    %v54 = vand.u32 %v41, 2147483648
    %v55 = vor.u32 1.1754944e-38, %v54
    %v56 = vsel %vm53, %v55, %v51
    %v57 = vmul.f32 1.0, %v56
    %v58 = vrcp.pop %v42
    %v59 = vmul.f32 %v42, %v58
    %v60 = vsub.f32 1.0, %v59
    %v61 = vmul.f32 %v58, %v60
    %v62 = vadd.f32 %v58, %v61
    %vm63 = vweird.f32 %v42
    %vm64 = vweird.f32 %v58
    %vm65 = vmor %vm63, %vm64
    %v66 = vsel %vm65, %v58, %v62
    %v67 = vand.u32 2147483647, %v42
    %vm68 = vcmp.eq.f32.partialorder %v67, 8.507059e+37
    %v69 = vand.u32 %v42, 2147483648
    %v70 = vor.u32 1.1754944e-38, %v69
    %v71 = vsel %vm68, %v70, %v66
    %v72 = vmul.f32 1.0, %v71
    %v73 = vstv %s32
    %v74 = vmul.f32 %v73, %v33
    %v75 = vmul.f32 %v73, %v34
    %v76 = vand.u32 2147483647, %v74
    %vm77 = vcmp.le.f32.partialorder %v76, 0.7853982
    %vm78 = vcmp.lt.s32.totalorder %v74, 0
    %v79 = vand.u32 %v74, 2139095040
    %v80 = vshrl.u32 %v79, 23
    %v81 = vsub.s32 %v80, 127
    %v82 = vand.u32 2147483647, %v74
    %v83 = vand.u32 %v82, 8388607
    %v84 = vor.u32 %v83, 8388608
    %v85 = vsub.s32 0, %v84
    %v86 = vadd.s32 %v81, 1
    %vm87 = vcmp.gt.s32.totalorder %v86, 0
    %v88 = vsel %vm87, %v86, 0
    %v89 = vshrl.u32 %v88, 5
    %v90 = vand.u32 %v88, 31
    %v91 = vsub.s32 32, %v90
    %v92 = vshrl.u32 683565275, %v91
    %v93 = vshll.u32 683565275, %v90
    %v94 = vshrl.u32 2475754826, %v91
    %v95 = vor.u32 %v93, %v94
    %v96 = vshll.u32 2475754826, %v90
    %v97 = vshrl.u32 2131351028, %v91
    %v98 = vor.u32 %v96, %v97
    %v99 = vshll.u32 2131351028, %v90
    %v100 = vshrl.u32 2102212464, %v91
    %v101 = vor.u32 %v99, %v100
    %v102 = vshll.u32 2102212464, %v90
    %v103 = vshrl.u32 920167782, %v91
    %v104 = vor.u32 %v102, %v103
    %v105 = vshll.u32 920167782, %v90
    %v106 = vshrl.u32 1326507024, %v91
    %v107 = vor.u32 %v105, %v106
    %vm108 = vcmp.lt.s32.totalorder %v89, 1
    %vm109 = vcmp.lt.s32.totalorder %v89, 2
    %vm110 = vcmp.lt.s32.totalorder %v89, 3
    %vm111 = vcmp.lt.s32.totalorder %v89, 4
    %v112 = vsel %vm108, %v92, %v95
    %v113 = vsel %vm111, %v101, 2102212464
    %v114 = vsel %vm110, %v98, %v113
    %v115 = vsel %vm109, %v112, %v114
    %v116 = vsel %vm108, %v95, %v98
    %v117 = vsel %vm111, %v104, 920167782
    %v118 = vsel %vm110, %v101, %v117
    %v119 = vsel %vm109, %v116, %v118
    %v120 = vsel %vm108, %v98, %v101
    %v121 = vsel %vm111, %v107, 1326507024
    %v122 = vsel %vm110, %v104, %v121
    %v123 = vsel %vm109, %v120, %v122
    %v124 = vshll.u32 %v84, 8
    %v125 = vand.u32 %v124, 65535
    %v126 = vshrl.u32 %v124, 16
    %v127 = vand.u32 %v123, 65535
    %v128 = vshrl.u32 %v123, 16
    %v129 = vmul.u32 %v125, %v127
    %v130 = vmul.u32 %v125, %v128
    %v131 = vmul.u32 %v126, %v127
    %v132 = vmul.u32 %v126, %v128
    %v133 = vshll.u32 %v130, 16
    %v134 = vshrl.u32 %v130, 16
    %v135 = vshll.u32 %v131, 16
    %v136 = vshrl.u32 %v131, 16
    %vm137 = vc.u32 %v129, %v133
    %v138 = vsel %vm137, 1, 0
    %v139 = vadd.s32 %v129, %v133
    %v140 = vadd.s32 %v132, %v138
    %vm141 = vc.u32 %v139, %v135
    %v142 = vsel %vm141, 1, 0
    %v143 = vadd.s32 %v139, %v135
    %v144 = vadd.s32 %v140, %v142
    %v145 = vadd.s32 %v144, %v134
    %v146 = vadd.s32 %v145, %v136
    %v147 = vand.u32 %v124, 65535
    %v148 = vshrl.u32 %v124, 16
    %v149 = vand.u32 %v119, 65535
    %v150 = vshrl.u32 %v119, 16
    %v151 = vmul.u32 %v147, %v149
    %v152 = vmul.u32 %v147, %v150
    %v153 = vmul.u32 %v148, %v149
    %v154 = vmul.u32 %v148, %v150
    %v155 = vshll.u32 %v152, 16
    %v156 = vshrl.u32 %v152, 16
    %v157 = vshll.u32 %v153, 16
    %v158 = vshrl.u32 %v153, 16
    %vm159 = vc.u32 %v151, %v155
    %v160 = vsel %vm159, 1, 0
    %v161 = vadd.s32 %v151, %v155
    %v162 = vadd.s32 %v154, %v160
    %vm163 = vc.u32 %v161, %v157
    %v164 = vsel %vm163, 1, 0
    %v165 = vadd.s32 %v161, %v157
    %v166 = vadd.s32 %v162, %v164
    %v167 = vadd.s32 %v166, %v156
    %v168 = vadd.s32 %v167, %v158
    %v169 = vmul.u32 %v124, %v115
    %v170 = vadd.s32 %v146, %v165
    %vm171 = vc.u32 %v146, %v165
    %v172 = vadd.s32 %v168, 1
    %v173 = vsel %vm171, %v172, %v168
    %v174 = vadd.s32 %v169, %v173
    %v175 = vadd.s32 %v174, 536870912
    %v176 = vshrl.u32 %v175, 30
    %v177 = vshll.u32 %v176, 30
    %v178 = vsub.s32 %v174, %v177
    %vm179 = vcmp.lt.s32.totalorder %v178, 0
    %v180 = vsub.s32 0, %v178
    %v181 = vsel %vm179, %v180, %v178
    %v182 = vclz %v181
    %v183 = vsub.s32 %v182, 2
    %vm184 = vcmp.gt.s32.totalorder 0, %v183
    %v185 = vsel %vm184, 0, %v183
    %v186 = vsub.s32 32, %v185
    %v187 = vshll.u32 %v178, %v185
    %v188 = vshrl.u32 %v170, %v186
    %v189 = vor.u32 %v187, %v188
    %v190 = vsub.s32 4294967266, %v185
    %v191 = vadd.s32 %v190, 127
    %v192 = vshll.u32 %v191, 23
    %v193 = vor.u32 4788187, %v192
    %v194 = vand.u32 2147483647, %v193
    %v196 = vcvt.s32.f32 %v189
    %v197 = vmul.f32 %v196, %v194
    %v198 = vxor.u32 %v197, 2147483648
    %v199 = vsel %vm78, %v198, %v197
    %v200 = vsub.s32 4, %v176
    %v201 = vsel %vm78, %v200, %v176
    %v202 = vsel %vm77, %v74, %v199
    %v203 = vsel %vm77, 0, %v201
    %v204 = vmul.f32 %v202, %v202
    %v205 = vmul.f32 %v204, -0.001358992
    %v206 = vadd.f32 %v205, 0.041655596
    %v207 = vmul.f32 %v204, %v206
    %v208 = vadd.f32 %v207, -0.4999988
    %v209 = vmul.f32 %v204, %v208
    %v210 = vadd.f32 1.0, %v209
    %v211 = vmul.f32 %v202, %v202
    %v212 = vmul.f32 %v211, -0.00019511016
    %v213 = vadd.f32 %v212, 0.008332121
    %v214 = vmul.f32 %v211, %v213
    %v215 = vadd.f32 %v214, -0.16666654
    %v216 = vmul.f32 %v211, %v215
    %v217 = vadd.f32 %v216, 1.0
    %v218 = vmul.f32 %v217, %v202
    %vm219 = vweird.f32 %v74
    %v220 = vand.u32 %v203, 3
    %vm221 = vcmp.lt.s32.totalorder %v220, 2
    %vm222 = vcmp.eq.s32.totalorder %v220, 0
    %v223 = vxor.u32 %v218, 2147483648
    %v224 = vsel %vm222, %v210, %v223
    %vm225 = vcmp.eq.s32.totalorder %v220, 2
    %v226 = vxor.u32 %v210, 2147483648
    %v227 = vsel %vm225, %v226, %v218
    %v228 = vsel %vm221, %v224, %v227
    %v229 = vsel %vm219, nan, %v228
    %v230 = vand.u32 2147483647, %v75
    %vm231 = vcmp.le.f32.partialorder %v230, 0.7853982
    %vm232 = vcmp.lt.s32.totalorder %v75, 0
    %v233 = vand.u32 %v75, 2139095040
    %v234 = vshrl.u32 %v233, 23
    %v235 = vsub.s32 %v234, 127
    %v236 = vand.u32 2147483647, %v75
    %v237 = vand.u32 %v236, 8388607
    %v238 = vor.u32 %v237, 8388608
    %v239 = vsub.s32 0, %v238
    %v240 = vadd.s32 %v235, 1
    %vm241 = vcmp.gt.s32.totalorder %v240, 0
    %v242 = vsel %vm241, %v240, 0
    %v243 = vshrl.u32 %v242, 5
    %v244 = vand.u32 %v242, 31
    %v245 = vsub.s32 32, %v244
    %v246 = vshrl.u32 683565275, %v245
    %v247 = vshll.u32 683565275, %v244
    %v248 = vshrl.u32 2475754826, %v245
    %v249 = vor.u32 %v247, %v248
    %v250 = vshll.u32 2475754826, %v244
    %v251 = vshrl.u32 2131351028, %v245
    %v252 = vor.u32 %v250, %v251
    %v253 = vshll.u32 2131351028, %v244
    %v254 = vshrl.u32 2102212464, %v245
    %v255 = vor.u32 %v253, %v254
    %v256 = vshll.u32 2102212464, %v244
    %v257 = vshrl.u32 920167782, %v245
    %v258 = vor.u32 %v256, %v257
    %v259 = vshll.u32 920167782, %v244
    %v260 = vshrl.u32 1326507024, %v245
    %v261 = vor.u32 %v259, %v260
    %vm262 = vcmp.lt.s32.totalorder %v243, 1
    %vm263 = vcmp.lt.s32.totalorder %v243, 2
    %vm264 = vcmp.lt.s32.totalorder %v243, 3
    %vm265 = vcmp.lt.s32.totalorder %v243, 4
    %v266 = vsel %vm262, %v246, %v249
    %v267 = vsel %vm265, %v255, 2102212464
    %v268 = vsel %vm264, %v252, %v267
    %v269 = vsel %vm263, %v266, %v268
    %v270 = vsel %vm262, %v249, %v252
    %v271 = vsel %vm265, %v258, 920167782
    %v272 = vsel %vm264, %v255, %v271
    %v273 = vsel %vm263, %v270, %v272
    %v274 = vsel %vm262, %v252, %v255
    %v275 = vsel %vm265, %v261, 1326507024
    %v276 = vsel %vm264, %v258, %v275
    %v277 = vsel %vm263, %v274, %v276
    %v278 = vshll.u32 %v238, 8
    %v279 = vand.u32 %v278, 65535
    %v280 = vshrl.u32 %v278, 16
    %v281 = vand.u32 %v277, 65535
    %v282 = vshrl.u32 %v277, 16
    %v283 = vmul.u32 %v279, %v281
    %v284 = vmul.u32 %v279, %v282
    %v285 = vmul.u32 %v280, %v281
    %v286 = vmul.u32 %v280, %v282
    %v287 = vshll.u32 %v284, 16
    %v288 = vshrl.u32 %v284, 16
    %v289 = vshll.u32 %v285, 16
    %v290 = vshrl.u32 %v285, 16
    %vm291 = vc.u32 %v283, %v287
    %v292 = vsel %vm291, 1, 0
    %v293 = vadd.s32 %v283, %v287
    %v294 = vadd.s32 %v286, %v292
    %vm295 = vc.u32 %v293, %v289
    %v296 = vsel %vm295, 1, 0
    %v297 = vadd.s32 %v293, %v289
    %v298 = vadd.s32 %v294, %v296
    %v299 = vadd.s32 %v298, %v288
    %v300 = vadd.s32 %v299, %v290
    %v301 = vand.u32 %v278, 65535
    %v302 = vshrl.u32 %v278, 16
    %v303 = vand.u32 %v273, 65535
    %v304 = vshrl.u32 %v273, 16
    %v305 = vmul.u32 %v301, %v303
    %v306 = vmul.u32 %v301, %v304
    %v307 = vmul.u32 %v302, %v303
    %v308 = vmul.u32 %v302, %v304
    %v309 = vshll.u32 %v306, 16
    %v310 = vshrl.u32 %v306, 16
    %v311 = vshll.u32 %v307, 16
    %v312 = vshrl.u32 %v307, 16
    %vm313 = vc.u32 %v305, %v309
    %v314 = vsel %vm313, 1, 0
    %v315 = vadd.s32 %v305, %v309
    %v316 = vadd.s32 %v308, %v314
    %vm317 = vc.u32 %v315, %v311
    %v318 = vsel %vm317, 1, 0
    %v319 = vadd.s32 %v315, %v311
    %v320 = vadd.s32 %v316, %v318
    %v321 = vadd.s32 %v320, %v310
    %v322 = vadd.s32 %v321, %v312
    %v323 = vmul.u32 %v278, %v269
    %v324 = vadd.s32 %v300, %v319
    %vm325 = vc.u32 %v300, %v319
    %v326 = vadd.s32 %v322, 1
    %v327 = vsel %vm325, %v326, %v322
    %v328 = vadd.s32 %v323, %v327
    %v329 = vadd.s32 %v328, 536870912
    %v330 = vshrl.u32 %v329, 30
    %v331 = vshll.u32 %v330, 30
    %v332 = vsub.s32 %v328, %v331
    %vm333 = vcmp.lt.s32.totalorder %v332, 0
    %v334 = vsub.s32 0, %v332
    %v335 = vsel %vm333, %v334, %v332
    %v336 = vclz %v335
    %v337 = vsub.s32 %v336, 2
    %vm338 = vcmp.gt.s32.totalorder 0, %v337
    %v339 = vsel %vm338, 0, %v337
    %v340 = vsub.s32 32, %v339
    %v341 = vshll.u32 %v332, %v339
    %v342 = vshrl.u32 %v324, %v340
    %v343 = vor.u32 %v341, %v342
    %v344 = vsub.s32 4294967266, %v339
    %v345 = vadd.s32 %v344, 127
    %v346 = vshll.u32 %v345, 23
    %v347 = vor.u32 4788187, %v346
    %v348 = vand.u32 2147483647, %v347
    %v350 = vcvt.s32.f32 %v343
    %v351 = vmul.f32 %v350, %v348
    %v352 = vxor.u32 %v351, 2147483648
    %v353 = vsel %vm232, %v352, %v351
    %v354 = vsub.s32 4, %v330
    %v355 = vsel %vm232, %v354, %v330
    %v356 = vsel %vm231, %v75, %v353
    %v357 = vsel %vm231, 0, %v355
    %v358 = vmul.f32 %v356, %v356
    %v359 = vmul.f32 %v358, -0.001358992
    %v360 = vadd.f32 %v359, 0.041655596
    %v361 = vmul.f32 %v358, %v360
    %v362 = vadd.f32 %v361, -0.4999988
    %v363 = vmul.f32 %v358, %v362
    %v364 = vadd.f32 1.0, %v363
    %v365 = vmul.f32 %v356, %v356
    %v366 = vmul.f32 %v365, -0.00019511016
    %v367 = vadd.f32 %v366, 0.008332121
    %v368 = vmul.f32 %v365, %v367
    %v369 = vadd.f32 %v368, -0.16666654
    %v370 = vmul.f32 %v365, %v369
    %v371 = vadd.f32 %v370, 1.0
    %v372 = vmul.f32 %v371, %v356
    %vm373 = vweird.f32 %v75
    %v374 = vand.u32 %v357, 3
    %vm375 = vcmp.lt.s32.totalorder %v374, 2
    %vm376 = vcmp.eq.s32.totalorder %v374, 0
    %v377 = vxor.u32 %v372, 2147483648
    %v378 = vsel %vm376, %v364, %v377
    %vm379 = vcmp.eq.s32.totalorder %v374, 2
    %v380 = vxor.u32 %v364, 2147483648
    %v381 = vsel %vm379, %v380, %v372
    %v382 = vsel %vm375, %v378, %v381
    %v383 = vsel %vm373, nan, %v382
    %v384 = vstv %s31
    %v385 = vmul.f32 %v384, %v229
    %v386 = vmul.f32 %v384, %v383
    %v387 = vadd.f32 %v33, %v385
    %v388 = vadd.f32 %v34, %v386
    %v389 = vmul.f32 %v387, %v57
    %v390 = vmul.f32 %v388, %v72
    %391 = vst [vmem:[#allocation7] sm:$0xff] %v389
    %392 = vst [vmem:[#allocation7 + $0x8] sm:$0xff] %v390
    // Predicated region
    $region18: #{tpu_custom_call.1} parent=1 // pred_check
      _
    $region19: #{tpu_custom_call.1} parent=1 // pred_check_branch
      %394 = sbr.rel (0) target = $region21
    $region20: #{tpu_custom_call.1} parent=1 // pred_region
      %396 = vsyncadd [#allocation6], 0
      %s398 = sshll.u32 [#allocation7], 4
      %s399 = int_to_ptr.vmem [resolvable:$true] %s398
      %s400 = sshll.u32 %s3, 4
      %s401 = int_to_ptr.hbm [resolvable:$true] %s400
      %403 = dma.vmem_to_hbm [thread:$0]  %s399, 256, %s401, [#allocation6]
    $region21: #{tpu_custom_call.1} parent=1 // pred_fallthru
      _
    // Predicated region
    $region22: #{tpu_custom_call.1} parent=1 // pred_check
      _
    $region23: #{tpu_custom_call.1} parent=1 // pred_check_branch
      %405 = sbr.rel (0) target = $region25
    $region24: #{tpu_custom_call.1} parent=1 // pred_region
      %407 = dma.done [#allocation6], 256
    $region25: #{tpu_custom_call.1} parent=1 // pred_fallthru
      _
    %408 = vsyncpa [#allocation5], 1
    %409 = vsyncpa [#allocation6], 1

</llo_original>
